<compile_context>
chip_gen: v7x
topology: tpu7x:2x2x1
jax: 0.10.0
libtpu: 0.0.40
codegen_flags: <defaults>
</compile_context>

<pallas_src>
import functools

import jax
import jax.numpy as jnp
from jax.experimental import pallas as pl
from jax.experimental.pallas import tpu as pltpu

ACTION_NUM = 2
HIDDEN = 16
OUT_LANES = 128  # lane-dense output slab width


def _round_up(x, m):
    return (x + m - 1) // m * m


def actor_kernel(state_ref, params_ref, u_ref, out_ref, *, S, H, A, SP):
    x = state_ref[...]                                   # (TB, S)
    P = params_ref[...]                                  # (SP + 2H + 8, H), resident

    # Static slices of the packed parameter buffer.
    w1 = P[0:S, :]                                       # (S, H)
    w2 = P[SP:SP + H, :]                                 # (H, H)
    w3 = P[SP + H:SP + 2 * H, 0:A]                       # (H, A)
    b1 = P[SP + 2 * H:SP + 2 * H + 1, :]                 # (1, H)
    b2 = P[SP + 2 * H + 1:SP + 2 * H + 2, :]             # (1, H)
    b3 = P[SP + 2 * H + 2:SP + 2 * H + 3, 0:A]           # (1, A)

    # fc1 + relu, fc2 + relu, fc3
    h1 = jnp.maximum(jnp.dot(x, w1, preferred_element_type=jnp.float32) + b1, 0.0)
    h2 = jnp.maximum(jnp.dot(h1, w2, preferred_element_type=jnp.float32) + b2, 0.0)
    logits = jnp.dot(h2, w3, preferred_element_type=jnp.float32) + b3    # (TB, A)

    # Numerically-safe softmax / log-softmax (no log(0) -> -inf path).
    m = jnp.max(logits, axis=1, keepdims=True)
    shifted = logits - m
    e = jnp.exp(shifted)
    denom = jnp.sum(e, axis=1, keepdims=True)            # (TB, 1)
    logp_all = shifted - jnp.log(denom)                  # log-softmax, always finite
    probs = e * pl.reciprocal(denom, approx=False)       # (TB, A)

    # Categorical sample via inverse CDF, entirely on the VPU (A is tiny & static).
    # act = #{ j in [0, A-2] : u > sum_{k<=j} p_k }  (naturally in [0, A-1])
    u = u_ref[...]                                       # (TB, 1)
    run = probs[:, 0:1]
    act = (u > run).astype(jnp.int32)
    for j in range(1, A - 1):                            # empty for A == 2
        run = run + probs[:, j:j + 1]
        act = act + (u > run).astype(jnp.int32)

    # log_prob(act): one-hot gather of the sampled action's log-probability.
    col = jax.lax.broadcasted_iota(jnp.int32, logp_all.shape, 1)
    logp = jnp.sum(jnp.where(col == act, logp_all, 0.0), axis=1, keepdims=True)

    # entropy = -sum p * log p
    ent = -jnp.sum(probs * logp_all, axis=1, keepdims=True)

    # Fuse outputs into one lane-dense slab: lane 0 = act (as f32), 1 = logp, 2 = ent.
    lane = jax.lax.broadcasted_iota(jnp.int32, out_ref.shape, 1)
    packed = jnp.where(lane == 0, act.astype(jnp.float32), 0.0)
    packed = jnp.where(lane == 1, logp, packed)
    packed = jnp.where(lane == 2, ent, packed)
    out_ref[...] = packed


def actor_forward(state, packed_params, u, *, state_dim, hidden=HIDDEN,
                  action_num=ACTION_NUM, tile_b=512):
    """state: (B, state_dim) f32; u: (B, 1) uniform [0,1) f32.

    Returns (act (B,) int32, act_log_prob (B,) f32, act_entropy (B,) f32)."""
    B = state.shape[0]
    S, H, A = state_dim, hidden, action_num
    SP = _round_up(S, 8)
    R = SP + 2 * H + 8
    assert packed_params.shape == (R, H)

    TILE_B = min(tile_b, _round_up(B, 8))
    Bp = _round_up(B, TILE_B)
    if Bp != B:
        state = jnp.pad(state, ((0, Bp - B), (0, 0)))
        u = jnp.pad(u, ((0, Bp - B), (0, 0)))

    kernel = functools.partial(actor_kernel, S=S, H=H, A=A, SP=SP)

    out = pl.pallas_call(
        kernel,
        out_shape=jax.ShapeDtypeStruct((Bp, OUT_LANES), jnp.float32),
        grid=(Bp // TILE_B,),
        in_specs=[
            pl.BlockSpec((TILE_B, S), lambda i: (i, 0)),   # batch tile of states
            pl.BlockSpec((R, H), lambda i: (0, 0)),        # packed params, resident
            pl.BlockSpec((TILE_B, 1), lambda i: (i, 0)),   # uniform randoms
        ],
        out_specs=pl.BlockSpec((TILE_B, OUT_LANES), lambda i: (i, 0)),
        compiler_params=pltpu.CompilerParams(
            dimension_semantics=("parallel",)),            # 2x on v7x megacore
    )(state, packed_params, u)

    out = out[:B]
    act = out[:, 0].astype(jnp.int32)
    logp = out[:, 1]
    ent = out[:, 2]
    return act, logp, ent


def init_params(key, state_dim, action_num):
    """Deterministic synthetic parameters (shapes match the nn.Linear layers).

    Stored as (in, out) so the kernel computes y = x @ W + b."""
    k1, k2, k3, k4, k5, k6 = jax.random.split(key, 6)
    w1 = jax.random.normal(k1, (state_dim, HIDDEN), jnp.float32) * 0.5
    b1 = jax.random.normal(k2, (1, HIDDEN), jnp.float32) * 0.1
    w2 = jax.random.normal(k3, (HIDDEN, HIDDEN), jnp.float32) * 0.5
    b2 = jax.random.normal(k4, (1, HIDDEN), jnp.float32) * 0.1
    w3 = jax.random.normal(k5, (HIDDEN, action_num), jnp.float32) * 0.5
    b3 = jax.random.normal(k6, (1, action_num), jnp.float32) * 0.1
    return (w1, b1, w2, b2, w3, b3)


def pack_params(w1, b1, w2, b2, w3, b3):
    """Pack all six tensors into a single (SP + 2H + 8, H) f32 buffer (one DMA)."""
    S, H = w1.shape
    A = w3.shape[1]
    SP = _round_up(S, 8)
    w1p = jnp.zeros((SP, H), jnp.float32).at[:S, :].set(w1)
    w3p = jnp.zeros((H, H), jnp.float32).at[:, :A].set(w3)
    bias = jnp.zeros((8, H), jnp.float32)
    bias = bias.at[0, :].set(b1[0])
    bias = bias.at[1, :].set(b2[0])
    bias = bias.at[2, :A].set(b3[0])
    return jnp.concatenate([w1p, w2, w3p, bias], axis=0)


if __name__ == "__main__":
    key = jax.random.PRNGKey(0)
    k_state, k_params, k_u = jax.random.split(key, 3)

    B = 16
    STATE_DIM = 4

    state = jax.random.normal(k_state, (B, STATE_DIM), jnp.float32)
    w1, b1, w2, b2, w3, b3 = init_params(k_params, STATE_DIM, ACTION_NUM)
    packed_params = pack_params(w1, b1, w2, b2, w3, b3)
    # Uniform randoms driving the categorical sample (inverse-CDF inside the kernel).
    # TODO(synk): Torch's Categorical.sample() RNG stream itself has no Pallas
    # equivalent; sampling uses these host-supplied uniforms instead.
    u = jax.random.uniform(k_u, (B, 1), jnp.float32)

    # tile_b=8 exercises the batch grid (2 tiles) even at this toy size.
    act, act_log_prob, act_entropy = actor_forward(
        state, packed_params, u, state_dim=STATE_DIM, tile_b=8)
    jax.block_until_ready((act, act_log_prob, act_entropy))

    # Light sanity checks against a pure-JAX reference of the same math.
    h1 = jnp.maximum(state @ w1 + b1, 0.0)
    h2 = jnp.maximum(h1 @ w2 + b2, 0.0)
    logits = h2 @ w3 + b3
    probs = jax.nn.softmax(logits, axis=1)
    ref_ent = -jnp.sum(probs * jnp.log(probs), axis=1)
    cdf = jnp.cumsum(probs, axis=1)
    ref_act = jnp.sum((u > cdf[:, :ACTION_NUM - 1]).astype(jnp.int32), axis=1)
    ref_logp = jnp.log(probs[jnp.arange(B), ref_act])

    assert act.shape == (B,) and act_log_prob.shape == (B,) and act_entropy.shape == (B,)
    assert bool(jnp.all(act == ref_act))
    assert bool(jnp.allclose(act_entropy, ref_ent, atol=1e-5))
    assert bool(jnp.allclose(act_log_prob, ref_logp, atol=1e-5))

    print("KERNEL_OK")
</pallas_src>

<mosaic_0001>
module attributes {stable_mosaic.version = 11 : i64} {
  func.func @actor_kernel(%arg0: i32, %arg1: memref<8x4xf32, #tpu.memory_space<vmem>>, %arg2: memref<48x16xf32, #tpu.memory_space<vmem>>, %arg3: memref<8x1xf32, #tpu.memory_space<vmem>>, %arg4: memref<8x128xf32, #tpu.memory_space<vmem>>) attributes {dimension_semantics = [#tpu.dimension_semantics<parallel>], iteration_bounds = array<i64: 2>, scalar_prefetch = 0 : i64, scratch_operands = 0 : i64, tpu.core_type = #tpu.core_type<tc>, window_params = [{transform_indices = @transform_0, window_bounds = array<i64: 8, 4>}, {pipeline_mode = #tpu.pipeline_mode<synchronous>, transform_indices = @transform_1, window_bounds = array<i64: 48, 16>}, {transform_indices = @transform_2, window_bounds = array<i64: 8, 1>}, {transform_indices = @transform_3, window_bounds = array<i64: 8, 128>}]} {
    %c0 = arith.constant 0 : index
    %c0_0 = arith.constant 0 : index
    %0 = vector.load %arg1[%c0, %c0_0] : memref<8x4xf32, #tpu.memory_space<vmem>>, vector<8x4xf32>
    %c0_1 = arith.constant 0 : index
    %c0_2 = arith.constant 0 : index
    %1 = vector.load %arg2[%c0_1, %c0_2] : memref<48x16xf32, #tpu.memory_space<vmem>>, vector<48x16xf32>
    %2 = vector.extract_strided_slice %1 {offsets = [0, 0], sizes = [4, 16], strides = [1, 1]} : vector<48x16xf32> to vector<4x16xf32>
    %3 = vector.extract_strided_slice %1 {offsets = [8, 0], sizes = [16, 16], strides = [1, 1]} : vector<48x16xf32> to vector<16x16xf32>
    %4 = vector.extract_strided_slice %1 {offsets = [24, 0], sizes = [16, 2], strides = [1, 1]} : vector<48x16xf32> to vector<16x2xf32>
    %5 = vector.extract_strided_slice %1 {offsets = [40, 0], sizes = [1, 16], strides = [1, 1]} : vector<48x16xf32> to vector<1x16xf32>
    %6 = vector.extract_strided_slice %1 {offsets = [41, 0], sizes = [1, 16], strides = [1, 1]} : vector<48x16xf32> to vector<1x16xf32>
    %7 = vector.extract_strided_slice %1 {offsets = [42, 0], sizes = [1, 2], strides = [1, 1]} : vector<48x16xf32> to vector<1x2xf32>
    %cst = arith.constant dense<0.000000e+00> : vector<8x16xf32>
    %8 = tpu.matmul %0, %2, %cst {dimension_numbers = #tpu.dot_dimension_numbers<[1], [0], [0], [1], [0, 0, 1, 1], [], []>} : vector<8x4xf32>, vector<4x16xf32>, vector<8x16xf32> -> vector<8x16xf32>
    %9 = vector.broadcast %5 : vector<1x16xf32> to vector<8x16xf32>
    %10 = arith.addf %8, %9 : vector<8x16xf32>
    %cst_3 = arith.constant 0.000000e+00 : f32
    %11 = vector.broadcast %cst_3 : f32 to vector<8x16xf32>
    %12 = arith.maximumf %10, %11 : vector<8x16xf32>
    %cst_4 = arith.constant dense<0.000000e+00> : vector<8x16xf32>
    %13 = tpu.matmul %12, %3, %cst_4 {dimension_numbers = #tpu.dot_dimension_numbers<[1], [0], [0], [1], [0, 0, 1, 1], [], []>} : vector<8x16xf32>, vector<16x16xf32>, vector<8x16xf32> -> vector<8x16xf32>
    %14 = vector.broadcast %6 : vector<1x16xf32> to vector<8x16xf32>
    %15 = arith.addf %13, %14 : vector<8x16xf32>
    %cst_5 = arith.constant 0.000000e+00 : f32
    %16 = vector.broadcast %cst_5 : f32 to vector<8x16xf32>
    %17 = arith.maximumf %15, %16 : vector<8x16xf32>
    %cst_6 = arith.constant dense<0.000000e+00> : vector<8x2xf32>
    %18 = tpu.matmul %17, %4, %cst_6 {dimension_numbers = #tpu.dot_dimension_numbers<[1], [0], [0], [1], [0, 0, 1, 1], [], []>} : vector<8x16xf32>, vector<16x2xf32>, vector<8x2xf32> -> vector<8x2xf32>
    %19 = vector.broadcast %7 : vector<1x2xf32> to vector<8x2xf32>
    %20 = arith.addf %18, %19 : vector<8x2xf32>
    %cst_7 = arith.constant dense<0xFF800000> : vector<8xf32>
    %21 = vector.multi_reduction <maximumf>, %20, %cst_7 [1] : vector<8x2xf32> to vector<8xf32>
    %22 = vector.shape_cast %21 : vector<8xf32> to vector<8x1xf32>
    %23 = vector.broadcast %22 : vector<8x1xf32> to vector<8x2xf32>
    %24 = arith.subf %20, %23 : vector<8x2xf32>
    %25 = math.exp %24 : vector<8x2xf32>
    %cst_8 = arith.constant dense<0.000000e+00> : vector<8xf32>
    %26 = vector.multi_reduction <add>, %25, %cst_8 [1] : vector<8x2xf32> to vector<8xf32>
    %27 = vector.shape_cast %26 : vector<8xf32> to vector<8x1xf32>
    %28 = math.log %27 : vector<8x1xf32>
    %29 = vector.broadcast %28 : vector<8x1xf32> to vector<8x2xf32>
    %30 = arith.subf %24, %29 : vector<8x2xf32>
    %31 = tpu.reciprocal %27 : vector<8x1xf32> -> vector<8x1xf32>
    %32 = vector.broadcast %31 : vector<8x1xf32> to vector<8x2xf32>
    %33 = arith.mulf %25, %32 : vector<8x2xf32>
    %c0_9 = arith.constant 0 : index
    %c0_10 = arith.constant 0 : index
    %34 = vector.load %arg3[%c0_9, %c0_10] : memref<8x1xf32, #tpu.memory_space<vmem>>, vector<8x1xf32>
    %35 = vector.extract_strided_slice %33 {offsets = [0, 0], sizes = [8, 1], strides = [1, 1]} : vector<8x2xf32> to vector<8x1xf32>
    %36 = arith.cmpf ogt, %34, %35 : vector<8x1xf32>
    %37 = arith.extui %36 : vector<8x1xi1> to vector<8x1xi32>
    %38 = tpu.iota {dimensions = array<i32: 1>} : vector<8x2xi32>
    %39 = vector.broadcast %37 : vector<8x1xi32> to vector<8x2xi32>
    %40 = arith.cmpi eq, %38, %39 : vector<8x2xi32>
    %cst_11 = arith.constant 0.000000e+00 : f32
    %41 = vector.broadcast %cst_11 : f32 to vector<8x2xf32>
    %42 = arith.select %40, %30, %41 : vector<8x2xi1>, vector<8x2xf32>
    %cst_12 = arith.constant dense<0.000000e+00> : vector<8xf32>
    %43 = vector.multi_reduction <add>, %42, %cst_12 [1] : vector<8x2xf32> to vector<8xf32>
    %44 = vector.shape_cast %43 : vector<8xf32> to vector<8x1xf32>
    %45 = arith.mulf %33, %30 : vector<8x2xf32>
    %cst_13 = arith.constant dense<0.000000e+00> : vector<8xf32>
    %46 = vector.multi_reduction <add>, %45, %cst_13 [1] : vector<8x2xf32> to vector<8xf32>
    %47 = vector.shape_cast %46 : vector<8xf32> to vector<8x1xf32>
    %cst_14 = arith.constant 0.000000e+00 : f32
    %48 = vector.broadcast %cst_14 : f32 to vector<8x1xf32>
    %49 = arith.subf %48, %47 : vector<8x1xf32>
    %50 = tpu.iota {dimensions = array<i32: 1>} : vector<8x128xi32>
    %c0_i32 = arith.constant 0 : i32
    %51 = vector.broadcast %c0_i32 : i32 to vector<8x128xi32>
    %52 = arith.cmpi eq, %50, %51 : vector<8x128xi32>
    %53 = arith.sitofp %37 : vector<8x1xi32> to vector<8x1xf32>
    %cst_15 = arith.constant 0.000000e+00 : f32
    %54 = vector.shape_cast %53 : vector<8x1xf32> to vector<8x1xf32>
    %55 = vector.broadcast %54 : vector<8x1xf32> to vector<8x128xf32>
    %56 = vector.broadcast %cst_15 : f32 to vector<8x128xf32>
    %57 = arith.select %52, %55, %56 : vector<8x128xi1>, vector<8x128xf32>
    %c1_i32 = arith.constant 1 : i32
    %58 = vector.broadcast %c1_i32 : i32 to vector<8x128xi32>
    %59 = arith.cmpi eq, %50, %58 : vector<8x128xi32>
    %60 = vector.shape_cast %44 : vector<8x1xf32> to vector<8x1xf32>
    %61 = vector.broadcast %60 : vector<8x1xf32> to vector<8x128xf32>
    %62 = arith.select %59, %61, %57 : vector<8x128xi1>, vector<8x128xf32>
    %c2_i32 = arith.constant 2 : i32
    %63 = vector.broadcast %c2_i32 : i32 to vector<8x128xi32>
    %64 = arith.cmpi eq, %50, %63 : vector<8x128xi32>
    %65 = vector.shape_cast %49 : vector<8x1xf32> to vector<8x1xf32>
    %66 = vector.broadcast %65 : vector<8x1xf32> to vector<8x128xf32>
    %67 = arith.select %64, %66, %62 : vector<8x128xi1>, vector<8x128xf32>
    %c0_16 = arith.constant 0 : index
    %c0_17 = arith.constant 0 : index
    %68 = vector.load %arg4[%c0_16, %c0_17] : memref<8x128xf32, #tpu.memory_space<vmem>>, vector<8x128xf32>
    tpu.vector_store %arg4[%c0_16, %c0_17], %67 {strides = array<i32>} : memref<8x128xf32, #tpu.memory_space<vmem>>, vector<8x128xf32>,
    return
  }
  func.func @transform_0(%arg0: i32) -> (i32, i32) {
    %c0_i32 = arith.constant 0 : i32
    %c0_i32_0 = arith.constant 0 : i32
    return %arg0, %c0_i32 : i32, i32
  }
  func.func @transform_1(%arg0: i32) -> (i32, i32) {
    %c0_i32 = arith.constant 0 : i32
    %c0_i32_0 = arith.constant 0 : i32
    %c0_i32_1 = arith.constant 0 : i32
    return %c0_i32, %c0_i32_0 : i32, i32
  }
  func.func @transform_2(%arg0: i32) -> (i32, i32) {
    %c0_i32 = arith.constant 0 : i32
    %c0_i32_0 = arith.constant 0 : i32
    return %arg0, %c0_i32 : i32, i32
  }
  func.func @transform_3(%arg0: i32) -> (i32, i32) {
    %c0_i32 = arith.constant 0 : i32
    %c0_i32_0 = arith.constant 0 : i32
    return %arg0, %c0_i32 : i32, i32
  }
}

</mosaic_0001>

<llo_original>
// kernel: tpu_custom_call.1
$region0: #{tpu_custom_call.1}
  #allocation0 [shape = 'u32[]', space=smem, size = 0x4, offset = 0x4, fixed_abs, tag = 'smem constant byte address 0x4 - core index']
  #allocation1 [shape = 'u32[144,128]{1,0:T(1,128)}', space=vmem, size = 0x12000, scoped, tag = 'internal scratch']
  %s0 = inlined_call_operand.vmem [shape: f32[16,4], index: 0, kind: input, shape index: {}]
  %s1 = inlined_call_operand.vmem [shape: f32[48,16], index: 1, kind: input, shape index: {}]
  %s2 = inlined_call_operand.vmem [shape: f32[16,1], index: 2, kind: input, shape index: {}]
  %s3 = inlined_call_operand.hbm [shape: f32[16,128], index: 3, kind: output, shape index: {}]
  %s4 = sld [smem:[#allocation0]]
  $region45: #{tpu_custom_call.1} parent=0
    _
  %s6 = ssub.s32 1, %s4
  %s7 = scalar_select 0, %s6, %s4
  $region1: #{tpu_custom_call.1} parent=0
    #allocation2 [shape = 'u8[8192]{0}', space=vmem, size = 0x2000, scoped, tag = 'output window, operand 0']
    #allocation3 [shape = 's32[2]{0}', space=sflag, size = 0x8, scoped, tag = 'scoped memory for tpu_custom_call.1']
    %8 = vsyncpa [#allocation3], 0
    %s9 = scalar_lea.sflag [#allocation3], 1
    %10 = vsyncpa %s9, 0
    loop: start=0, step=1, limit=4
    $region2: #{tpu_custom_call.1} parent=1 // loop_pre_header
      _
    $region3: #{tpu_custom_call.1} parent=1 // loop_header
      %s12 = sphi 0, %s16
      %p13 = scmp.ge.s32.totalorder %s12, 4
      %s22 = sphi 0, %s24
      %s25 = sphi 0, %s22
      %s26 = sphi 0, %s25
      %s42 = sphi 0, %s26
      %s46 = sphi 0, %s46
      %s48 = sphi 0, %s46
      %s49 = sphi 0, %s48
      %s63 = sphi 0, %s49
      %s69 = sphi 0, %s71
      %s72 = sphi 0, %s69
      %s73 = sphi 0, %s72
      %s89 = sphi 0, %s73
      %s95 = sphi 0, %s97
      %s98 = sphi 0, %s95
      %s99 = sphi 0, %s98
      %s115 = sphi 0, %s99
    $region4: #{tpu_custom_call.1} parent=1 // loop_header_branch
      %15 = sbr.rel (%p13) target = $region8
    $region5: #{tpu_custom_call.1} parent=1 // loop_body
      %s17 = ssub.s32 %s12, 1
      %s18 = ssub.s32 %s12, 2
      %s19 = sadd.s32 %s12, 1
      %s20 = ssub.s32 %s12, %s19
      %p21 = scmp.eq.s32.totalorder %s20, 0
      %s23 = sadd.s32 %s22, 1
      %s24 = scalar_select %p21, %s22, %s23
      %p27 = pneg %p21
      %p28 = scmp.eq.s32.totalorder %s12, 1
      %p29 = por %p27, %p28
      %p30 = scmp.ne.s32.totalorder %s22, %s25
      %p31 = scmp.eq.s32.totalorder %s12, 0
      %p32 = por %p30, %p31
      %p33 = scmp.ne.s32.totalorder %s22, %s25
      %p34 = scmp.eq.s32.totalorder %s17, 1
      %p35 = por %p33, %p34
      %p36 = scmp.ne.s32.totalorder %s25, %s26
      %p37 = scmp.eq.s32.totalorder %s17, 0
      %p38 = por %p36, %p37
      %p39 = scmp.ne.s32.totalorder %s25, %s26
      %p40 = scmp.eq.s32.totalorder %s18, 1
      %p41 = por %p39, %p40
      %p43 = scmp.ne.s32.totalorder %s26, %s42
      %p44 = scmp.eq.s32.totalorder %s18, 0
      %p45 = por %p43, %p44
      %s47 = sadd.s32 %s46, 1
      %p50 = scmp.eq.s32.totalorder %s12, 1
      %p51 = scmp.ne.s32.totalorder %s46, %s48
      %p52 = scmp.eq.s32.totalorder %s12, 0
      %p53 = por %p51, %p52
      %p54 = scmp.ne.s32.totalorder %s46, %s48
      %p55 = scmp.eq.s32.totalorder %s17, 1
      %p56 = por %p54, %p55
      %p57 = scmp.ne.s32.totalorder %s48, %s49
      %p58 = scmp.eq.s32.totalorder %s17, 0
      %p59 = por %p57, %p58
      %p60 = scmp.ne.s32.totalorder %s48, %s49
      %p61 = scmp.eq.s32.totalorder %s18, 1
      %p62 = por %p60, %p61
      %p64 = scmp.ne.s32.totalorder %s49, %s63
      %p65 = scmp.eq.s32.totalorder %s18, 0
      %p66 = por %p64, %p65
      %s67 = ssub.s32 %s12, %s19
      %p68 = scmp.eq.s32.totalorder %s67, 0
      %s70 = sadd.s32 %s69, 1
      %s71 = scalar_select %p68, %s69, %s70
      %p74 = pneg %p68
      %p75 = scmp.eq.s32.totalorder %s12, 1
      %p76 = por %p74, %p75
      %p77 = scmp.ne.s32.totalorder %s69, %s72
      %p78 = scmp.eq.s32.totalorder %s12, 0
      %p79 = por %p77, %p78
      %p80 = scmp.ne.s32.totalorder %s69, %s72
      %p81 = scmp.eq.s32.totalorder %s17, 1
      %p82 = por %p80, %p81
      %p83 = scmp.ne.s32.totalorder %s72, %s73
      %p84 = scmp.eq.s32.totalorder %s17, 0
      %p85 = por %p83, %p84
      %p86 = scmp.ne.s32.totalorder %s72, %s73
      %p87 = scmp.eq.s32.totalorder %s18, 1
      %p88 = por %p86, %p87
      %p90 = scmp.ne.s32.totalorder %s73, %s89
      %p91 = scmp.eq.s32.totalorder %s18, 0
      %p92 = por %p90, %p91
      %s93 = ssub.s32 %s12, %s19
      %p94 = scmp.eq.s32.totalorder %s93, 0
      %s96 = sadd.s32 %s95, 1
      %s97 = scalar_select %p94, %s95, %s96
      %p100 = pneg %p94
      %p101 = scmp.eq.s32.totalorder %s12, 1
      %p102 = por %p100, %p101
      %p103 = scmp.ne.s32.totalorder %s95, %s98
      %p104 = scmp.eq.s32.totalorder %s12, 0
      %p105 = por %p103, %p104
      %p106 = scmp.ne.s32.totalorder %s95, %s98
      %p107 = scmp.eq.s32.totalorder %s17, 1
      %p108 = por %p106, %p107
      %p109 = scmp.ne.s32.totalorder %s98, %s99
      %p110 = scmp.eq.s32.totalorder %s17, 0
      %p111 = por %p109, %p110
      %p112 = scmp.ne.s32.totalorder %s98, %s99
      %p113 = scmp.eq.s32.totalorder %s18, 1
      %p114 = por %p112, %p113
      %p116 = scmp.ne.s32.totalorder %s99, %s115
      %p117 = scmp.eq.s32.totalorder %s18, 0
      %p118 = por %p116, %p117
      %p119 = scmp.le.s32.totalorder 1, %s12
      %p120 = scmp.lt.s32.totalorder %s12, 3
      %p121 = pnand %p119, %p120
      %p122 = pneg %p121
      // Predicated region
      $region9: #{tpu_custom_call.1} parent=5 // pred_check
        _
      $region10: #{tpu_custom_call.1} parent=5 // pred_check_branch
        %124 = sbr.rel (%p121) target = $region12
      $region11: #{tpu_custom_call.1} parent=5 // pred_region
        %s125 = ssub.s32 %s12, 1
        // Predicated region
        $region13: #{tpu_custom_call.1} parent=11 // pred_check
          %p126 = pneg %p59
        $region14: #{tpu_custom_call.1} parent=11 // pred_check_branch
          %128 = sbr.rel (%p126) target = $region16
        $region15: #{tpu_custom_call.1} parent=11 // pred_region
          _
        $region16: #{tpu_custom_call.1} parent=11 // pred_fallthru
          _
      $region12: #{tpu_custom_call.1} parent=5 // pred_fallthru
        _
      %p129 = scmp.lt.s32.totalorder %s12, 2
      // Predicated region
      $region17: #{tpu_custom_call.1} parent=5 // pred_check
        %p130 = pneg %p129
      $region18: #{tpu_custom_call.1} parent=5 // pred_check_branch
        %132 = sbr.rel (%p130) target = $region20
      $region19: #{tpu_custom_call.1} parent=5 // pred_region
        // Predicated region
        $region21: #{tpu_custom_call.1} parent=19 // pred_check
          %p133 = pneg %p32
        $region22: #{tpu_custom_call.1} parent=19 // pred_check_branch
          %135 = sbr.rel (%p133) target = $region24
        $region23: #{tpu_custom_call.1} parent=19 // pred_region
          %p136 = scmp.lt.s32.totalorder %s12, 1
          %s137 = scalar_select %p136, %s12, 1
          %s138 = smul.addr %s137, 8
          %s139 = scalar_lea.vmem %s0, %s138
        $region24: #{tpu_custom_call.1} parent=19 // pred_fallthru
          _
        // Predicated region
        $region25: #{tpu_custom_call.1} parent=19 // pred_check
          %p140 = pneg %p79
        $region26: #{tpu_custom_call.1} parent=19 // pred_check_branch
          %142 = sbr.rel (%p140) target = $region28
        $region27: #{tpu_custom_call.1} parent=19 // pred_region
          %p143 = scmp.lt.s32.totalorder %s12, 1
          %s144 = scalar_select %p143, %s12, 1
          %s145 = smul.addr %s144, 8
          %s146 = scalar_lea.vmem %s2, %s145
        $region28: #{tpu_custom_call.1} parent=19 // pred_fallthru
          _
      $region20: #{tpu_custom_call.1} parent=5 // pred_fallthru
        _
      %p147 = scmp.le.s32.totalorder 1, %s12
      %p148 = scmp.lt.s32.totalorder %s12, 3
      %p149 = pnand %p147, %p148
      %p150 = pneg %p149
      // Predicated region
      $region29: #{tpu_custom_call.1} parent=5 // pred_check
        _
      $region30: #{tpu_custom_call.1} parent=5 // pred_check_branch
        %152 = sbr.rel (%p149) target = $region32
      $region31: #{tpu_custom_call.1} parent=5 // pred_region
        %s153 = ssub.s32 %s12, 1
        %p154 = scmp.lt.s32.totalorder %s17, 1
        %s155 = scalar_select %p154, %s17, 1
        %s156 = smul.addr %s155, 8
        %s157 = scalar_lea.vmem %s0, %s156
        %p158 = pneg %p38
        %p159 = pneg %p35
        %p160 = pneg %p59
        %p161 = pneg %p56
        %p162 = scmp.lt.s32.totalorder %s17, 1
        %s163 = scalar_select %p162, %s17, 1
        %s164 = smul.addr %s163, 8
        %s165 = scalar_lea.vmem %s2, %s164
        %p166 = pneg %p85
        %p167 = pneg %p82
        %p168 = pneg %p111
        %p169 = pneg %p108
        %s170 = sand.u32 %s98, 1
        %s171 = scalar_lea.sflag [#allocation3], %s170
        %s172 = sand.u32 %s98, 1
        %s173 = smul.addr %s172, 8
        %s174 = scalar_lea.vmem [#allocation2], %s173
        %p175 = scmp.lt.s32.totalorder %s17, 1
        %s176 = scalar_select %p175, %s17, 1
        %s177 = smul.addr %s176, 8
        %s178 = scalar_lea.vmem %s0, %s177
        %p179 = scmp.lt.s32.totalorder %s17, 1
        %s180 = scalar_select %p179, %s17, 1
        %s181 = smul.addr %s180, 8
        %s182 = scalar_lea.vmem %s2, %s181
        %v183 = vld [vmem:[%s178] sm:$0xff]
        %v184 = vld [vmem:[%s1] sm:$0xff]
        %v185 = vld [vmem:[%s1 + $0x8] sm:$0xff]
        %v186 = vld [vmem:[%s1 + $0x10] sm:$0xff]
        %v187 = vld [vmem:[%s1 + $0x18] sm:$0xff]
        %v188 = vld [vmem:[%s1 + $0x20] sm:$0xff]
        %v189 = vld [vmem:[%s1 + $0x28] sm:$0xff]
        %v190 = vlaneseq
        %v191 = vshrl.u32 %v190, 7
        %v192 = vsub.s32 0, %v191
        %v193 = vrot.slane %v189, %v192
        %vm194 = vcmask 31744
        %v196 = vsel %vm194, %v183, 0
        %vm198 = vcmask 1043456
        %v200 = vsel %vm198, %v184, 0
        %202 = vmatprep.subr.mxu0 0.0
        %203 = vmatpush1.msra.mxu0 %v200
        %204 = vmatprep.subr.mxu0 0.0
        %205 = vmatpush1.msra.mxu0 0.0
        %206 = vmatprep.subr.mxu0 0.0
        %207 = vmatpush1.msra.mxu0 0.0
        %208 = vmatprep.subr.mxu0 0.0
        %209 = vmatpush1.msra.mxu0 0.0
        %210 = vmatprep.subr.mxu0 0.0
        %211 = vmatpush1.msra.mxu0 0.0
        %212 = vmatprep.subr.mxu0 0.0
        %213 = vmatpush1.msra.mxu0 0.0
        %214 = vmatprep.subr.mxu0 0.0
        %215 = vmatpush1.msra.mxu0 0.0
        %216 = vmatprep.subr.mxu0 0.0
        %217 = vmatpush1.msra.mxu0 0.0
        %218 = vmatprep.subr.mxu0 0.0
        %219 = vmatpush1.msra.mxu0 0.0
        %220 = vmatprep.subr.mxu0 0.0
        %221 = vmatpush1.msra.mxu0 0.0
        %222 = vmatprep.subr.mxu0 0.0
        %223 = vmatpush1.msra.mxu0 0.0
        %224 = vmatprep.subr.mxu0 0.0
        %225 = vmatpush1.msra.mxu0 0.0
        %226 = vmatprep.subr.mxu0 0.0
        %227 = vmatpush1.msra.mxu0 0.0
        %228 = vmatprep.subr.mxu0 0.0
        %229 = vmatpush1.msra.mxu0 0.0
        %230 = vmatprep.subr.mxu0 0.0
        %231 = vmatpush1.msra.mxu0 0.0
        %232 = vmatprep.subr.mxu0 0.0
        %233 = vmatpush1.msra.mxu0 0.0
        %234 = vmatprep.subr.mxu0 0.0
        %235 = vmatpush1.msra.mxu0 0.0
        %236 = vmatprep.subr.mxu0 0.0
        %237 = vmatpush1.msra.mxu0 0.0
        %238 = vmatprep.subr.mxu0 0.0
        %239 = vmatpush1.msra.mxu0 0.0
        %240 = vmatprep.subr.mxu0 0.0
        %241 = vmatpush1.msra.mxu0 0.0
        %242 = vmatprep.subr.mxu0 0.0
        %243 = vmatpush1.msra.mxu0 0.0
        %244 = vmatprep.subr.mxu0 0.0
        %245 = vmatpush1.msra.mxu0 0.0
        %246 = vmatprep.subr.mxu0 0.0
        %247 = vmatpush1.msra.mxu0 0.0
        %248 = vmatprep.subr.mxu0 0.0
        %249 = vmatpush1.msra.mxu0 0.0
        %250 = vmatprep.subr.mxu0 0.0
        %251 = vmatpush1.msra.mxu0 0.0
        %252 = vmatprep.subr.mxu0 0.0
        %253 = vmatpush1.msra.mxu0 0.0
        %254 = vmatprep.subr.mxu0 0.0
        %255 = vmatpush1.msra.mxu0 0.0
        %256 = vmatprep.subr.mxu0 0.0
        %257 = vmatpush1.msra.mxu0 0.0
        %258 = vmatprep.subr.mxu0 0.0
        %259 = vmatpush1.msra.mxu0 0.0
        %260 = vmatprep.subr.mxu0 0.0
        %261 = vmatpush1.msra.mxu0 0.0
        %262 = vmatprep.subr.mxu0 0.0
        %263 = vmatpush1.msra.mxu0 0.0
        %264 = vmatprep.subr.mxu0 0.0
        %265 = vmatpush1.msra.mxu0 0.0
        %266 = vmatprep.mubr.f32.mxu0 0.0
        %267 = vmatmul.mubr.f32.gmra.mrb[0].mxu0 %v196
        %v268 = vpop.f32.mrb[0].mxu0
        %v269 = vadd.f32 %v193, %v268
        %v270 = vpop.f32.mrb[0].mxu0
        %271 = vdwg.mxu0
        %v272 = vmax.f32 %v269, 0.0
        %v273 = vlaneseq
        %v274 = vshrl.u32 %v273, 7
        %v275 = vsub.s32 1, %v274
        %v276 = vrot.slane %v189, %v275
        %vm277 = vcmask 130048
        %v279 = vsel %vm277, %v272, 0
        %281 = vmatprep.subr.mxu0 0.0
        %282 = vmatpush1.msra.mxu0 %v185
        %283 = vmatprep.subr.mxu0 0.0
        %284 = vmatpush1.msra.mxu0 %v186
        %285 = vmatprep.subr.mxu0 0.0
        %286 = vmatpush1.msra.mxu0 0.0
        %287 = vmatprep.subr.mxu0 0.0
        %288 = vmatpush1.msra.mxu0 0.0
        %289 = vmatprep.subr.mxu0 0.0
        %290 = vmatpush1.msra.mxu0 0.0
        %291 = vmatprep.subr.mxu0 0.0
        %292 = vmatpush1.msra.mxu0 0.0
        %293 = vmatprep.subr.mxu0 0.0
        %294 = vmatpush1.msra.mxu0 0.0
        %295 = vmatprep.subr.mxu0 0.0
        %296 = vmatpush1.msra.mxu0 0.0
        %297 = vmatprep.subr.mxu0 0.0
        %298 = vmatpush1.msra.mxu0 0.0
        %299 = vmatprep.subr.mxu0 0.0
        %300 = vmatpush1.msra.mxu0 0.0
        %301 = vmatprep.subr.mxu0 0.0
        %302 = vmatpush1.msra.mxu0 0.0
        %303 = vmatprep.subr.mxu0 0.0
        %304 = vmatpush1.msra.mxu0 0.0
        %305 = vmatprep.subr.mxu0 0.0
        %306 = vmatpush1.msra.mxu0 0.0
        %307 = vmatprep.subr.mxu0 0.0
        %308 = vmatpush1.msra.mxu0 0.0
        %309 = vmatprep.subr.mxu0 0.0
        %310 = vmatpush1.msra.mxu0 0.0
        %311 = vmatprep.subr.mxu0 0.0
        %312 = vmatpush1.msra.mxu0 0.0
        %313 = vmatprep.subr.mxu0 0.0
        %314 = vmatpush1.msra.mxu0 0.0
        %315 = vmatprep.subr.mxu0 0.0
        %316 = vmatpush1.msra.mxu0 0.0
        %317 = vmatprep.subr.mxu0 0.0
        %318 = vmatpush1.msra.mxu0 0.0
        %319 = vmatprep.subr.mxu0 0.0
        %320 = vmatpush1.msra.mxu0 0.0
        %321 = vmatprep.subr.mxu0 0.0
        %322 = vmatpush1.msra.mxu0 0.0
        %323 = vmatprep.subr.mxu0 0.0
        %324 = vmatpush1.msra.mxu0 0.0
        %325 = vmatprep.subr.mxu0 0.0
        %326 = vmatpush1.msra.mxu0 0.0
        %327 = vmatprep.subr.mxu0 0.0
        %328 = vmatpush1.msra.mxu0 0.0
        %329 = vmatprep.subr.mxu0 0.0
        %330 = vmatpush1.msra.mxu0 0.0
        %331 = vmatprep.subr.mxu0 0.0
        %332 = vmatpush1.msra.mxu0 0.0
        %333 = vmatprep.subr.mxu0 0.0
        %334 = vmatpush1.msra.mxu0 0.0
        %335 = vmatprep.subr.mxu0 0.0
        %336 = vmatpush1.msra.mxu0 0.0
        %337 = vmatprep.subr.mxu0 0.0
        %338 = vmatpush1.msra.mxu0 0.0
        %339 = vmatprep.subr.mxu0 0.0
        %340 = vmatpush1.msra.mxu0 0.0
        %341 = vmatprep.subr.mxu0 0.0
        %342 = vmatpush1.msra.mxu0 0.0
        %343 = vmatprep.subr.mxu0 0.0
        %344 = vmatpush1.msra.mxu0 0.0
        %345 = vmatprep.mubr.f32.mxu0 0.0
        %346 = vmatmul.mubr.f32.gmra.mrb[0].mxu0 %v279
        %v347 = vpop.f32.mrb[0].mxu0
        %v348 = vadd.f32 %v276, %v347
        %v349 = vpop.f32.mrb[0].mxu0
        %350 = vdwg.mxu0
        %v351 = vmax.f32 %v348, 0.0
        %v352 = vlaneseq
        %v353 = vshrl.u32 %v352, 7
        %v354 = vsub.s32 2, %v353
        %v355 = vrot.slane %v189, %v354
        %v357 = vsel %vm277, %v351, 0
        %359 = vmatprep.subr.mxu0 0.0
        %360 = vmatpush1.msra.mxu0 %v187
        %361 = vmatprep.subr.mxu0 0.0
        %362 = vmatpush1.msra.mxu0 %v188
        %363 = vmatprep.subr.mxu0 0.0
        %364 = vmatpush1.msra.mxu0 0.0
        %365 = vmatprep.subr.mxu0 0.0
        %366 = vmatpush1.msra.mxu0 0.0
        %367 = vmatprep.subr.mxu0 0.0
        %368 = vmatpush1.msra.mxu0 0.0
        %369 = vmatprep.subr.mxu0 0.0
        %370 = vmatpush1.msra.mxu0 0.0
        %371 = vmatprep.subr.mxu0 0.0
        %372 = vmatpush1.msra.mxu0 0.0
        %373 = vmatprep.subr.mxu0 0.0
        %374 = vmatpush1.msra.mxu0 0.0
        %375 = vmatprep.subr.mxu0 0.0
        %376 = vmatpush1.msra.mxu0 0.0
        %377 = vmatprep.subr.mxu0 0.0
        %378 = vmatpush1.msra.mxu0 0.0
        %379 = vmatprep.subr.mxu0 0.0
        %380 = vmatpush1.msra.mxu0 0.0
        %381 = vmatprep.subr.mxu0 0.0
        %382 = vmatpush1.msra.mxu0 0.0
        %383 = vmatprep.subr.mxu0 0.0
        %384 = vmatpush1.msra.mxu0 0.0
        %385 = vmatprep.subr.mxu0 0.0
        %386 = vmatpush1.msra.mxu0 0.0
        %387 = vmatprep.subr.mxu0 0.0
        %388 = vmatpush1.msra.mxu0 0.0
        %389 = vmatprep.subr.mxu0 0.0
        %390 = vmatpush1.msra.mxu0 0.0
        %391 = vmatprep.subr.mxu0 0.0
        %392 = vmatpush1.msra.mxu0 0.0
        %393 = vmatprep.subr.mxu0 0.0
        %394 = vmatpush1.msra.mxu0 0.0
        %395 = vmatprep.subr.mxu0 0.0
        %396 = vmatpush1.msra.mxu0 0.0
        %397 = vmatprep.subr.mxu0 0.0
        %398 = vmatpush1.msra.mxu0 0.0
        %399 = vmatprep.subr.mxu0 0.0
        %400 = vmatpush1.msra.mxu0 0.0
        %401 = vmatprep.subr.mxu0 0.0
        %402 = vmatpush1.msra.mxu0 0.0
        %403 = vmatprep.subr.mxu0 0.0
        %404 = vmatpush1.msra.mxu0 0.0
        %405 = vmatprep.subr.mxu0 0.0
        %406 = vmatpush1.msra.mxu0 0.0
        %407 = vmatprep.subr.mxu0 0.0
        %408 = vmatpush1.msra.mxu0 0.0
        %409 = vmatprep.subr.mxu0 0.0
        %410 = vmatpush1.msra.mxu0 0.0
        %411 = vmatprep.subr.mxu0 0.0
        %412 = vmatpush1.msra.mxu0 0.0
        %413 = vmatprep.subr.mxu0 0.0
        %414 = vmatpush1.msra.mxu0 0.0
        %415 = vmatprep.subr.mxu0 0.0
        %416 = vmatpush1.msra.mxu0 0.0
        %417 = vmatprep.subr.mxu0 0.0
        %418 = vmatpush1.msra.mxu0 0.0
        %419 = vmatprep.subr.mxu0 0.0
        %420 = vmatpush1.msra.mxu0 0.0
        %421 = vmatprep.subr.mxu0 0.0
        %422 = vmatpush1.msra.mxu0 0.0
        %423 = vmatprep.mubr.f32.mxu0 0.0
        %424 = vmatmul.mubr.f32.gmra.mrb[0].mxu0 %v357
        %v425 = vpop.f32.mrb[0].mxu0
        %v426 = vadd.f32 %v355, %v425
        %v427 = vpop.f32.mrb[0].mxu0
        %428 = vdwg.mxu0
        %vm429 = vcmask 15360
        %v430 = vsel %vm429, %v426, -inf
        %431 = vmax.xlane.f32.xlu0 %v430
        %v432 = vpop.xlane.xlu0 %431
        %v433 = vsub.f32 %v426, %v432
        %v434 = vmul.f32 %v433, 1.442695
        %v435 = vpow.pop %v434
        %v436 = vsel %vm429, %v435, 0.0
        %437 = vadd.xlane.f32.xlu0 %v436
        %v438 = vpop.xlane.xlu0 %437
        %v439 = vlog2.pop %v438
        %v440 = vmul.f32 %v439, 0.6931472
        %v441 = vsub.f32 %v433, %v440
        %v442 = vrcp.pop %v438
        %v443 = vmul.f32 %v435, %v442
        %v444 = vld [vmem:[%s182] sm:$0xff]
        %vm445 = vcmp.gt.f32.partialorder %v444, %v443
        %v446 = vsel %vm445, 1, 0
        %v447 = vlaneseq
        %v448 = vand.u32 %v447, 127
        %449 = vset.pattern.permute.xlu0 0
        %450 = vperm.xlu0 %449, %v446
        %v451 = vpop.permute.xlu0 %450
        %vm452 = vcmp.eq.s32.totalorder %v448, %v451
        %v453 = vsel %vm452, %v441, 0.0
        %v454 = vsel %vm429, %v453, 0.0
        %455 = vadd.xlane.f32.xlu0 %v454
        %v456 = vpop.xlane.xlu0 %455
        %v457 = vmul.f32 %v443, %v441
        %v458 = vsel %vm429, %v457, 0.0
        %459 = vadd.xlane.f32.xlu0 %v458
        %v460 = vpop.xlane.xlu0 %459
        %v461 = vsub.f32 0.0, %v460
        %vm462 = vcmp.eq.s32.totalorder %v448, 0
        %v463 = vcvt.s32.f32 %v446
        %465 = vset.pattern.permute.xlu0 0
        %466 = vperm.xlu0 %465, %v463
        %v467 = vpop.permute.xlu0 %466
        %v469 = vsel %vm462, %v467, 0.0
        %vm470 = vcmp.eq.s32.totalorder %v448, 1
        %v471 = vsel %vm470, %v456, %v469
        %vm472 = vcmp.eq.s32.totalorder %v448, 2
        %v473 = vsel %vm472, %v461, %v471
        %474 = vst [vmem:[%s174] sm:$0xff] %v473
        %s475 = sand.u32 %s98, 1
        %s476 = scalar_lea.sflag [#allocation3], %s475
        %s477 = sand.u32 %s98, 1
        %s478 = smul.addr %s477, 8
        %s479 = scalar_lea.vmem [#allocation2], %s478
        // Predicated region
        $region33: #{tpu_custom_call.1} parent=31 // pred_check
          %p480 = pneg %p108
        $region34: #{tpu_custom_call.1} parent=31 // pred_check_branch
          %482 = sbr.rel (%p480) target = $region36
        $region35: #{tpu_custom_call.1} parent=31 // pred_region
          %s484 = ssub.s32 128, 128
          %485 = vsyncadd %s476, %s484
          %s486 = smul.addr %s17, 128
          %s487 = scalar_lea.hbm %s3, %s486
          %s489 = sshll.u32 %s479, 4
          %s490 = int_to_ptr.vmem [resolvable:$true] %s489
          %492 = dma.vmem_to_hbm [thread:$0]  %s490, 128, %s487, %s476
        $region36: #{tpu_custom_call.1} parent=31 // pred_fallthru
          _
      $region32: #{tpu_custom_call.1} parent=5 // pred_fallthru
        _
      %p493 = scmp.le.s32.totalorder 2, %s12
      // Predicated region
      $region37: #{tpu_custom_call.1} parent=5 // pred_check
        %p494 = pneg %p493
      $region38: #{tpu_custom_call.1} parent=5 // pred_check_branch
        %496 = sbr.rel (%p494) target = $region40
      $region39: #{tpu_custom_call.1} parent=5 // pred_region
        %s497 = ssub.s32 %s12, 2
        // Predicated region
        $region41: #{tpu_custom_call.1} parent=39 // pred_check
          %p498 = pneg %p114
        $region42: #{tpu_custom_call.1} parent=39 // pred_check_branch
          %500 = sbr.rel (%p498) target = $region44
        $region43: #{tpu_custom_call.1} parent=39 // pred_region
          %s501 = sand.u32 %s99, 1
          %s502 = scalar_lea.sflag [#allocation3], %s501
          %s503 = sand.u32 %s99, 1
          %s504 = smul.addr %s503, 8
          %s505 = scalar_lea.vmem [#allocation2], %s504
          %506 = dma.done %s502, 128
        $region44: #{tpu_custom_call.1} parent=39 // pred_fallthru
          _
      $region40: #{tpu_custom_call.1} parent=5 // pred_fallthru
        _
    $region6: #{tpu_custom_call.1} parent=1 // loop_footer
      %s16 = sadd.s32 1, %s12
    $region7: #{tpu_custom_call.1} parent=1 // loop_footer_branch
      %11 = sbr.rel target = $region3
    $region8: #{tpu_custom_call.1} parent=1 // loop_exit
      _
    %507 = vsyncpa [#allocation3], 1
    %s508 = scalar_lea.sflag [#allocation3], 1
    %509 = vsyncpa %s508, 1

</llo_original>
